<compile_context>
chip_gen: v7x
topology: tpu7x:2x2x1
jax: 0.10.0
libtpu: 0.0.40
codegen_flags: <defaults>
</compile_context>

<pallas_src>
import functools

import jax
import jax.numpy as jnp
from jax.experimental import pallas as pl
from jax.experimental.pallas import tpu as pltpu

SELU_ALPHA = 1.6732632423543772848170429916717
SELU_SCALE = 1.0507009873554804934193349852946


# ---------------------------------------------------------------------------
# Fused Pallas kernel: full MLP (n_layer x (linear + activation)) in one body.
# ---------------------------------------------------------------------------
def _fused_mlp_kernel(num_layers, output_dim, *refs):
    # refs = (x_ref, w0_ref, b0_ref, w1_ref, b1_ref, ..., o_ref)
    x_ref = refs[0]
    o_ref = refs[-1]
    layer_refs = refs[1:-1]

    h = x_ref[...]  # (TB, in_dim) f32
    for li in range(num_layers):  # static Python loop: traced once, fully unrolled
        w = layer_refs[2 * li][...]                      # (fan_in, fan_out), f32 or bf16
        b = layer_refs[2 * li + 1][...].astype(jnp.float32)  # (1, fan_out)
        # MXU matmul: operands in the weight dtype, accumulate in f32.
        y = jnp.dot(h.astype(w.dtype), w, preferred_element_type=jnp.float32) + b
        if li < num_layers - 1:
            # SELU in f32 (VPU select + EUP exp) — correct on all generations incl. v5e.
            h = SELU_SCALE * jnp.where(y > 0.0, y, SELU_ALPHA * (jnp.exp(y) - 1.0))
        else:
            if output_dim > 1:
                # Softmax over dim=1; the full feature row lives in this block.
                m = jnp.max(y, axis=-1, keepdims=True)
                e = jnp.exp(y - m)
                h = e / jnp.sum(e, axis=-1, keepdims=True)   # exact divide (torch parity)
            else:
                h = 1.0 / (1.0 + jnp.exp(-y))                # exact sigmoid
    o_ref[...] = h.astype(o_ref.dtype)


def _round_up(x, m):
    return -(-x // m) * m


# ---------------------------------------------------------------------------
# Wrapper: one pallas_call for the whole network.
# ---------------------------------------------------------------------------
def nn_forward(params, x, output_dim, *, block_batch=2048):
    """params: list of (w_t, b) with w_t shaped (fan_in, fan_out)."""
    batch, in_dim = x.shape
    num_layers = len(params)

    # ---- batch tiling ------------------------------------------------------
    # Small batch: one full-extent tile.  Large batch: big tiles (amortise the
    # per-grid-step overhead) but always >= 2 grid steps so v7x's two
    # TensorCores both get work under dimension_semantics=("parallel",).
    if batch <= 256:
        tb = batch
    else:
        tb = min(block_batch, _round_up(pl.cdiv(batch, 2), 8))
        tb = max(tb, 8)
    grid = (pl.cdiv(batch, tb),)

    # ---- explicit VMEM budget ----------------------------------------------
    wt_bytes = 0
    max_width = in_dim
    for w_t, b in params:
        wt_bytes += w_t.size * w_t.dtype.itemsize + b.size * b.dtype.itemsize
        max_width = max(max_width, w_t.shape[1])
    needed = (2 * tb * in_dim * 4            # double-buffered x tiles
              + 2 * tb * output_dim * 4      # double-buffered out tiles
              + 2 * wt_bytes                 # weights/biases (worst case: double-buffered)
              + 4 * tb * max_width * 4)      # live f32 intermediates
    # >= 32 MiB (above v5e's 16 MiB scoped default), <= 48 MiB (safe on v7x's 64 MiB).
    vmem_limit = int(min(max(2 * needed, 32 << 20), 48 << 20))

    inputs = [x]
    for w_t, b in params:
        inputs.append(w_t)
        inputs.append(b.reshape(1, -1))

    def build_in_specs(single_buffer_weights):
        specs = [pl.BlockSpec((tb, in_dim), lambda i: (i, 0))]
        for w_t, _ in params:
            fan_in, fan_out = w_t.shape
            if single_buffer_weights:
                # Constant index_map -> block never changes; single buffer halves weight VMEM.
                specs.append(pl.BlockSpec((fan_in, fan_out), lambda i: (0, 0),
                                          pipeline_mode=pl.Buffered(1)))
                specs.append(pl.BlockSpec((1, fan_out), lambda i: (0, 0),
                                          pipeline_mode=pl.Buffered(1)))
            else:
                specs.append(pl.BlockSpec((fan_in, fan_out), lambda i: (0, 0)))
                specs.append(pl.BlockSpec((1, fan_out), lambda i: (0, 0)))
        return specs

    kernel = functools.partial(_fused_mlp_kernel, num_layers, output_dim)
    out_shape = jax.ShapeDtypeStruct((batch, output_dim), jnp.float32)
    out_spec = pl.BlockSpec((tb, output_dim), lambda i: (i, 0))
    cparams = pltpu.CompilerParams(
        dimension_semantics=("parallel",),   # batch tiles shard across TCs on v7x
        vmem_limit_bytes=vmem_limit,
    )

    def run(single_buffer_weights):
        return pl.pallas_call(
            kernel,
            grid=grid,
            in_specs=build_in_specs(single_buffer_weights),
            out_specs=out_spec,
            out_shape=out_shape,
            compiler_params=cparams,
        )(*inputs)

    try:
        return run(True)
    except Exception:
        # Fallback if this jax/mosaic build rejects pl.Buffered(1); default double-buffering.
        return run(False)


# ---------------------------------------------------------------------------
# Parameter construction (deterministic, mirrors nn.Linear shapes)
# ---------------------------------------------------------------------------
def init_nn_params(key, input_dim, hidden_dim, output_dim, n_layer, dtype=jnp.float32):
    dims = []
    if n_layer > 1:
        dims.append((input_dim, hidden_dim))
        for _ in range(n_layer - 2):
            dims.append((hidden_dim, hidden_dim))
        dims.append((hidden_dim, output_dim))
    else:
        dims.append((input_dim, output_dim))

    params = []
    for (fan_in, fan_out) in dims:
        key, kw, kb = jax.random.split(key, 3)
        bound = 1.0 / jnp.sqrt(jnp.float32(fan_in))
        # weight stored transposed (in, out) for the kernel; optionally bf16
        w_t = jax.random.uniform(kw, (fan_in, fan_out), jnp.float32, -bound, bound).astype(dtype)
        b = jax.random.uniform(kb, (fan_out,), jnp.float32, -bound, bound)  # bias kept f32
        params.append((w_t, b))
    return params


# ---------------------------------------------------------------------------
# Pure-JAX reference for sanity checks (same dtype path as the kernel)
# ---------------------------------------------------------------------------
def nn_forward_ref(params, x, output_dim):
    h = x
    for li, (w_t, b) in enumerate(params):
        y = jnp.dot(h.astype(w_t.dtype), w_t, preferred_element_type=jnp.float32)
        y = y + b.astype(jnp.float32)
        if li < len(params) - 1:
            h = SELU_SCALE * jnp.where(y > 0, y, SELU_ALPHA * (jnp.exp(y) - 1.0))
        else:
            h = jax.nn.softmax(y, axis=1) if output_dim > 1 else jax.nn.sigmoid(y)
    return h


if __name__ == "__main__":
    key = jax.random.PRNGKey(0)

    # --- Test 1: multi-layer net, softmax head, small batch (single tile) ---
    batch, input_dim, hidden_dim, output_dim, n_layer = 8, 16, 32, 4, 3
    key, kx, kp = jax.random.split(key, 3)
    x = jax.random.normal(kx, (batch, input_dim), jnp.float32)
    params = init_nn_params(kp, input_dim, hidden_dim, output_dim, n_layer)

    out = jax.block_until_ready(nn_forward(params, x, output_dim))
    ref = nn_forward_ref(params, x, output_dim)
    assert out.shape == (batch, output_dim)
    assert jnp.allclose(out, ref, atol=1e-4, rtol=1e-4), "softmax net mismatch vs JAX reference"
    assert jnp.allclose(jnp.sum(out, axis=1), 1.0, atol=1e-4)

    # --- Test 2: single-layer net, sigmoid head (n_layer == 1, output_dim == 1) ---
    key, kx1, kp1 = jax.random.split(key, 3)
    x1 = jax.random.normal(kx1, (batch, input_dim), jnp.float32)
    params1 = init_nn_params(kp1, input_dim, hidden_dim, 1, 1)
    out1 = jax.block_until_ready(nn_forward(params1, x1, 1))
    ref1 = nn_forward_ref(params1, x1, 1)
    assert out1.shape == (batch, 1)
    assert jnp.allclose(out1, ref1, atol=1e-4, rtol=1e-4), "sigmoid net mismatch vs JAX reference"

    # --- Test 3: large batch, no wrapper pad/slice, partial last tile (grid = 2) ---
    big_batch = 1037  # not a multiple of the tile -> exercises Pallas block masking
    key, kx2 = jax.random.split(key)
    x2 = jax.random.normal(kx2, (big_batch, input_dim), jnp.float32)
    out2 = jax.block_until_ready(nn_forward(params, x2, output_dim))
    ref2 = nn_forward_ref(params, x2, output_dim)
    assert out2.shape == (big_batch, output_dim)
    assert jnp.allclose(out2, ref2, atol=1e-4, rtol=1e-4), "tiled path mismatch vs JAX reference"

    # --- Test 4: bf16 weights (f32 accumulation + f32 elementwise math) ---
    key, kp3 = jax.random.split(key)
    params_bf16 = init_nn_params(kp3, input_dim, hidden_dim, output_dim, n_layer,
                                 dtype=jnp.bfloat16)
    out3 = jax.block_until_ready(nn_forward(params_bf16, x2, output_dim))
    ref3 = nn_forward_ref(params_bf16, x2, output_dim)
    assert jnp.allclose(out3, ref3, atol=2e-3, rtol=2e-3), "bf16-weight path mismatch"

    print("KERNEL_OK")
</pallas_src>

<mosaic_0001>
module attributes {stable_mosaic.version = 11 : i64} {
  func.func @_fused_mlp_kernel(%arg0: i32, %arg1: memref<8x16xf32, #tpu.memory_space<vmem>>, %arg2: memref<16x32xf32, #tpu.memory_space<vmem>>, %arg3: memref<1x32xf32, #tpu.memory_space<vmem>>, %arg4: memref<32x32xf32, #tpu.memory_space<vmem>>, %arg5: memref<1x32xf32, #tpu.memory_space<vmem>>, %arg6: memref<32x4xf32, #tpu.memory_space<vmem>>, %arg7: memref<1x4xf32, #tpu.memory_space<vmem>>, %arg8: memref<8x4xf32, #tpu.memory_space<vmem>>) attributes {dimension_semantics = [#tpu.dimension_semantics<parallel>], iteration_bounds = array<i64: 1>, scalar_prefetch = 0 : i64, scratch_operands = 0 : i64, tpu.core_type = #tpu.core_type<tc>, window_params = [{transform_indices = @transform_0, window_bounds = array<i64: 8, 16>}, {pipeline_mode = #tpu.pipeline_mode<synchronous>, transform_indices = @transform_1, window_bounds = array<i64: 16, 32>}, {pipeline_mode = #tpu.pipeline_mode<synchronous>, transform_indices = @transform_2, window_bounds = array<i64: 1, 32>}, {pipeline_mode = #tpu.pipeline_mode<synchronous>, transform_indices = @transform_3, window_bounds = array<i64: 32, 32>}, {pipeline_mode = #tpu.pipeline_mode<synchronous>, transform_indices = @transform_4, window_bounds = array<i64: 1, 32>}, {pipeline_mode = #tpu.pipeline_mode<synchronous>, transform_indices = @transform_5, window_bounds = array<i64: 32, 4>}, {pipeline_mode = #tpu.pipeline_mode<synchronous>, transform_indices = @transform_6, window_bounds = array<i64: 1, 4>}, {transform_indices = @transform_7, window_bounds = array<i64: 8, 4>}]} {
    %c0 = arith.constant 0 : index
    %c0_0 = arith.constant 0 : index
    %0 = vector.load %arg1[%c0, %c0_0] : memref<8x16xf32, #tpu.memory_space<vmem>>, vector<8x16xf32>
    %c0_1 = arith.constant 0 : index
    %c0_2 = arith.constant 0 : index
    %1 = vector.load %arg2[%c0_1, %c0_2] : memref<16x32xf32, #tpu.memory_space<vmem>>, vector<16x32xf32>
    %c0_3 = arith.constant 0 : index
    %c0_4 = arith.constant 0 : index
    %2 = vector.load %arg3[%c0_3, %c0_4] : memref<1x32xf32, #tpu.memory_space<vmem>>, vector<1x32xf32>
    %cst = arith.constant dense<0.000000e+00> : vector<8x32xf32>
    %3 = tpu.matmul %0, %1, %cst {dimension_numbers = #tpu.dot_dimension_numbers<[1], [0], [0], [1], [0, 0, 1, 1], [], []>} : vector<8x16xf32>, vector<16x32xf32>, vector<8x32xf32> -> vector<8x32xf32>
    %4 = vector.broadcast %2 : vector<1x32xf32> to vector<8x32xf32>
    %5 = arith.addf %3, %4 : vector<8x32xf32>
    %cst_5 = arith.constant 0.000000e+00 : f32
    %6 = vector.broadcast %cst_5 : f32 to vector<8x32xf32>
    %7 = arith.cmpf ogt, %5, %6 : vector<8x32xf32>
    %8 = math.exp %5 : vector<8x32xf32>
    %cst_6 = arith.constant 1.000000e+00 : f32
    %9 = vector.broadcast %cst_6 : f32 to vector<8x32xf32>
    %10 = arith.subf %8, %9 : vector<8x32xf32>
    %cst_7 = arith.constant 1.67326319 : f32
    %11 = vector.broadcast %cst_7 : f32 to vector<8x32xf32>
    %12 = arith.mulf %11, %10 : vector<8x32xf32>
    %13 = arith.select %7, %5, %12 : vector<8x32xi1>, vector<8x32xf32>
    %cst_8 = arith.constant 1.05070102 : f32
    %14 = vector.broadcast %cst_8 : f32 to vector<8x32xf32>
    %15 = arith.mulf %14, %13 : vector<8x32xf32>
    %c0_9 = arith.constant 0 : index
    %c0_10 = arith.constant 0 : index
    %16 = vector.load %arg4[%c0_9, %c0_10] : memref<32x32xf32, #tpu.memory_space<vmem>>, vector<32x32xf32>
    %c0_11 = arith.constant 0 : index
    %c0_12 = arith.constant 0 : index
    %17 = vector.load %arg5[%c0_11, %c0_12] : memref<1x32xf32, #tpu.memory_space<vmem>>, vector<1x32xf32>
    %cst_13 = arith.constant dense<0.000000e+00> : vector<8x32xf32>
    %18 = tpu.matmul %15, %16, %cst_13 {dimension_numbers = #tpu.dot_dimension_numbers<[1], [0], [0], [1], [0, 0, 1, 1], [], []>} : vector<8x32xf32>, vector<32x32xf32>, vector<8x32xf32> -> vector<8x32xf32>
    %19 = vector.broadcast %17 : vector<1x32xf32> to vector<8x32xf32>
    %20 = arith.addf %18, %19 : vector<8x32xf32>
    %cst_14 = arith.constant 0.000000e+00 : f32
    %21 = vector.broadcast %cst_14 : f32 to vector<8x32xf32>
    %22 = arith.cmpf ogt, %20, %21 : vector<8x32xf32>
    %23 = math.exp %20 : vector<8x32xf32>
    %cst_15 = arith.constant 1.000000e+00 : f32
    %24 = vector.broadcast %cst_15 : f32 to vector<8x32xf32>
    %25 = arith.subf %23, %24 : vector<8x32xf32>
    %cst_16 = arith.constant 1.67326319 : f32
    %26 = vector.broadcast %cst_16 : f32 to vector<8x32xf32>
    %27 = arith.mulf %26, %25 : vector<8x32xf32>
    %28 = arith.select %22, %20, %27 : vector<8x32xi1>, vector<8x32xf32>
    %cst_17 = arith.constant 1.05070102 : f32
    %29 = vector.broadcast %cst_17 : f32 to vector<8x32xf32>
    %30 = arith.mulf %29, %28 : vector<8x32xf32>
    %c0_18 = arith.constant 0 : index
    %c0_19 = arith.constant 0 : index
    %31 = vector.load %arg6[%c0_18, %c0_19] : memref<32x4xf32, #tpu.memory_space<vmem>>, vector<32x4xf32>
    %c0_20 = arith.constant 0 : index
    %c0_21 = arith.constant 0 : index
    %32 = vector.load %arg7[%c0_20, %c0_21] : memref<1x4xf32, #tpu.memory_space<vmem>>, vector<1x4xf32>
    %cst_22 = arith.constant dense<0.000000e+00> : vector<8x4xf32>
    %33 = tpu.matmul %30, %31, %cst_22 {dimension_numbers = #tpu.dot_dimension_numbers<[1], [0], [0], [1], [0, 0, 1, 1], [], []>} : vector<8x32xf32>, vector<32x4xf32>, vector<8x4xf32> -> vector<8x4xf32>
    %34 = vector.broadcast %32 : vector<1x4xf32> to vector<8x4xf32>
    %35 = arith.addf %33, %34 : vector<8x4xf32>
    %cst_23 = arith.constant dense<0xFF800000> : vector<8xf32>
    %36 = vector.multi_reduction <maximumf>, %35, %cst_23 [1] : vector<8x4xf32> to vector<8xf32>
    %37 = vector.shape_cast %36 : vector<8xf32> to vector<8x1xf32>
    %38 = vector.broadcast %37 : vector<8x1xf32> to vector<8x4xf32>
    %39 = arith.subf %35, %38 : vector<8x4xf32>
    %40 = math.exp %39 : vector<8x4xf32>
    %cst_24 = arith.constant dense<0.000000e+00> : vector<8xf32>
    %41 = vector.multi_reduction <add>, %40, %cst_24 [1] : vector<8x4xf32> to vector<8xf32>
    %42 = vector.shape_cast %41 : vector<8xf32> to vector<8x1xf32>
    %43 = vector.broadcast %42 : vector<8x1xf32> to vector<8x4xf32>
    %44 = arith.divf %40, %43 : vector<8x4xf32>
    %c0_25 = arith.constant 0 : index
    %c0_26 = arith.constant 0 : index
    %45 = vector.load %arg8[%c0_25, %c0_26] : memref<8x4xf32, #tpu.memory_space<vmem>>, vector<8x4xf32>
    tpu.vector_store %arg8[%c0_25, %c0_26], %44 {strides = array<i32>} : memref<8x4xf32, #tpu.memory_space<vmem>>, vector<8x4xf32>,
    return
  }
  func.func @transform_0(%arg0: i32) -> (i32, i32) {
    %c0_i32 = arith.constant 0 : i32
    %c0_i32_0 = arith.constant 0 : i32
    return %arg0, %c0_i32 : i32, i32
  }
  func.func @transform_1(%arg0: i32) -> (i32, i32) {
    %c0_i32 = arith.constant 0 : i32
    %c0_i32_0 = arith.constant 0 : i32
    %c0_i32_1 = arith.constant 0 : i32
    return %c0_i32, %c0_i32_0 : i32, i32
  }
  func.func @transform_2(%arg0: i32) -> (i32, i32) {
    %c0_i32 = arith.constant 0 : i32
    %c0_i32_0 = arith.constant 0 : i32
    %c0_i32_1 = arith.constant 0 : i32
    return %c0_i32, %c0_i32_0 : i32, i32
  }
  func.func @transform_3(%arg0: i32) -> (i32, i32) {
    %c0_i32 = arith.constant 0 : i32
    %c0_i32_0 = arith.constant 0 : i32
    %c0_i32_1 = arith.constant 0 : i32
    return %c0_i32, %c0_i32_0 : i32, i32
  }
  func.func @transform_4(%arg0: i32) -> (i32, i32) {
    %c0_i32 = arith.constant 0 : i32
    %c0_i32_0 = arith.constant 0 : i32
    %c0_i32_1 = arith.constant 0 : i32
    return %c0_i32, %c0_i32_0 : i32, i32
  }
  func.func @transform_5(%arg0: i32) -> (i32, i32) {
    %c0_i32 = arith.constant 0 : i32
    %c0_i32_0 = arith.constant 0 : i32
    %c0_i32_1 = arith.constant 0 : i32
    return %c0_i32, %c0_i32_0 : i32, i32
  }
  func.func @transform_6(%arg0: i32) -> (i32, i32) {
    %c0_i32 = arith.constant 0 : i32
    %c0_i32_0 = arith.constant 0 : i32
    %c0_i32_1 = arith.constant 0 : i32
    return %c0_i32, %c0_i32_0 : i32, i32
  }
  func.func @transform_7(%arg0: i32) -> (i32, i32) {
    %c0_i32 = arith.constant 0 : i32
    %c0_i32_0 = arith.constant 0 : i32
    return %arg0, %c0_i32 : i32, i32
  }
}

module attributes {stable_mosaic.version = 11 : i64} {
  func.func @_fused_mlp_kernel(%arg0: i32, %arg1: memref<8x16xf32, #tpu.memory_space<vmem>>, %arg2: memref<16x32xf32, #tpu.memory_space<vmem>>, %arg3: memref<1x32xf32, #tpu.memory_space<vmem>>, %arg4: memref<32x32xf32, #tpu.memory_space<vmem>>, %arg5: memref<1x32xf32, #tpu.memory_space<vmem>>, %arg6: memref<32x4xf32, #tpu.memory_space<vmem>>, %arg7: memref<1x4xf32, #tpu.memory_space<vmem>>, %arg8: memref<8x4xf32, #tpu.memory_space<vmem>>) attributes {dimension_semantics = [#tpu.dimension_semantics<parallel>], iteration_bounds = array<i64: 1>, scalar_prefetch = 0 : i64, scratch_operands = 0 : i64, tpu.core_type = #tpu.core_type<tc>, window_params = [{transform_indices = @transform_0, window_bounds = array<i64: 8, 16>}, {pipeline_mode = #tpu.pipeline_mode<synchronous>, transform_indices = @transform_1, window_bounds = array<i64: 16, 32>}, {pipeline_mode = #tpu.pipeline_mode<synchronous>, transform_indices = @transform_2, window_bounds = array<i64: 1, 32>}, {pipeline_mode = #tpu.pipeline_mode<synchronous>, transform_indices = @transform_3, window_bounds = array<i64: 32, 32>}, {pipeline_mode = #tpu.pipeline_mode<synchronous>, transform_indices = @transform_4, window_bounds = array<i64: 1, 32>}, {pipeline_mode = #tpu.pipeline_mode<synchronous>, transform_indices = @transform_5, window_bounds = array<i64: 32, 4>}, {pipeline_mode = #tpu.pipeline_mode<synchronous>, transform_indices = @transform_6, window_bounds = array<i64: 1, 4>}, {transform_indices = @transform_7, window_bounds = array<i64: 8, 4>}]} {
    %c0 = arith.constant 0 : index
    %c0_0 = arith.constant 0 : index
    %0 = vector.load %arg1[%c0, %c0_0] : memref<8x16xf32, #tpu.memory_space<vmem>>, vector<8x16xf32>
    %c0_1 = arith.constant 0 : index
    %c0_2 = arith.constant 0 : index
    %1 = vector.load %arg2[%c0_1, %c0_2] : memref<16x32xf32, #tpu.memory_space<vmem>>, vector<16x32xf32>
    %c0_3 = arith.constant 0 : index
    %c0_4 = arith.constant 0 : index
    %2 = vector.load %arg3[%c0_3, %c0_4] : memref<1x32xf32, #tpu.memory_space<vmem>>, vector<1x32xf32>
    %cst = arith.constant dense<0.000000e+00> : vector<8x32xf32>
    %3 = tpu.matmul %0, %1, %cst {dimension_numbers = #tpu.dot_dimension_numbers<[1], [0], [0], [1], [0, 0, 1, 1], [], []>} : vector<8x16xf32>, vector<16x32xf32>, vector<8x32xf32> -> vector<8x32xf32>
    %4 = vector.broadcast %2 : vector<1x32xf32> to vector<8x32xf32>
    %5 = arith.addf %3, %4 : vector<8x32xf32>
    %cst_5 = arith.constant 0.000000e+00 : f32
    %6 = vector.broadcast %cst_5 : f32 to vector<8x32xf32>
    %7 = arith.cmpf ogt, %5, %6 : vector<8x32xf32>
    %8 = math.exp %5 : vector<8x32xf32>
    %cst_6 = arith.constant 1.000000e+00 : f32
    %9 = vector.broadcast %cst_6 : f32 to vector<8x32xf32>
    %10 = arith.subf %8, %9 : vector<8x32xf32>
    %cst_7 = arith.constant 1.67326319 : f32
    %11 = vector.broadcast %cst_7 : f32 to vector<8x32xf32>
    %12 = arith.mulf %11, %10 : vector<8x32xf32>
    %13 = arith.select %7, %5, %12 : vector<8x32xi1>, vector<8x32xf32>
    %cst_8 = arith.constant 1.05070102 : f32
    %14 = vector.broadcast %cst_8 : f32 to vector<8x32xf32>
    %15 = arith.mulf %14, %13 : vector<8x32xf32>
    %c0_9 = arith.constant 0 : index
    %c0_10 = arith.constant 0 : index
    %16 = vector.load %arg4[%c0_9, %c0_10] : memref<32x32xf32, #tpu.memory_space<vmem>>, vector<32x32xf32>
    %c0_11 = arith.constant 0 : index
    %c0_12 = arith.constant 0 : index
    %17 = vector.load %arg5[%c0_11, %c0_12] : memref<1x32xf32, #tpu.memory_space<vmem>>, vector<1x32xf32>
    %cst_13 = arith.constant dense<0.000000e+00> : vector<8x32xf32>
    %18 = tpu.matmul %15, %16, %cst_13 {dimension_numbers = #tpu.dot_dimension_numbers<[1], [0], [0], [1], [0, 0, 1, 1], [], []>} : vector<8x32xf32>, vector<32x32xf32>, vector<8x32xf32> -> vector<8x32xf32>
    %19 = vector.broadcast %17 : vector<1x32xf32> to vector<8x32xf32>
    %20 = arith.addf %18, %19 : vector<8x32xf32>
    %cst_14 = arith.constant 0.000000e+00 : f32
    %21 = vector.broadcast %cst_14 : f32 to vector<8x32xf32>
    %22 = arith.cmpf ogt, %20, %21 : vector<8x32xf32>
    %23 = math.exp %20 : vector<8x32xf32>
    %cst_15 = arith.constant 1.000000e+00 : f32
    %24 = vector.broadcast %cst_15 : f32 to vector<8x32xf32>
    %25 = arith.subf %23, %24 : vector<8x32xf32>
    %cst_16 = arith.constant 1.67326319 : f32
    %26 = vector.broadcast %cst_16 : f32 to vector<8x32xf32>
    %27 = arith.mulf %26, %25 : vector<8x32xf32>
    %28 = arith.select %22, %20, %27 : vector<8x32xi1>, vector<8x32xf32>
    %cst_17 = arith.constant 1.05070102 : f32
    %29 = vector.broadcast %cst_17 : f32 to vector<8x32xf32>
    %30 = arith.mulf %29, %28 : vector<8x32xf32>
    %c0_18 = arith.constant 0 : index
    %c0_19 = arith.constant 0 : index
    %31 = vector.load %arg6[%c0_18, %c0_19] : memref<32x4xf32, #tpu.memory_space<vmem>>, vector<32x4xf32>
    %c0_20 = arith.constant 0 : index
    %c0_21 = arith.constant 0 : index
    %32 = vector.load %arg7[%c0_20, %c0_21] : memref<1x4xf32, #tpu.memory_space<vmem>>, vector<1x4xf32>
    %cst_22 = arith.constant dense<0.000000e+00> : vector<8x4xf32>
    %33 = tpu.matmul %30, %31, %cst_22 {dimension_numbers = #tpu.dot_dimension_numbers<[1], [0], [0], [1], [0, 0, 1, 1], [], []>} : vector<8x32xf32>, vector<32x4xf32>, vector<8x4xf32> -> vector<8x4xf32>
    %34 = vector.broadcast %32 : vector<1x4xf32> to vector<8x4xf32>
    %35 = arith.addf %33, %34 : vector<8x4xf32>
    %cst_23 = arith.constant dense<0xFF800000> : vector<8xf32>
    %36 = vector.multi_reduction <maximumf>, %35, %cst_23 [1] : vector<8x4xf32> to vector<8xf32>
    %37 = vector.shape_cast %36 : vector<8xf32> to vector<8x1xf32>
    %38 = vector.broadcast %37 : vector<8x1xf32> to vector<8x4xf32>
    %39 = arith.subf %35, %38 : vector<8x4xf32>
    %40 = math.exp %39 : vector<8x4xf32>
    %cst_24 = arith.constant dense<0.000000e+00> : vector<8xf32>
    %41 = vector.multi_reduction <add>, %40, %cst_24 [1] : vector<8x4xf32> to vector<8xf32>
    %42 = vector.shape_cast %41 : vector<8xf32> to vector<8x1xf32>
    %43 = vector.broadcast %42 : vector<8x1xf32> to vector<8x4xf32>
    %44 = arith.divf %40, %43 : vector<8x4xf32>
    %c0_25 = arith.constant 0 : index
    %c0_26 = arith.constant 0 : index
    %45 = vector.load %arg8[%c0_25, %c0_26] : memref<8x4xf32, #tpu.memory_space<vmem>>, vector<8x4xf32>
    tpu.vector_store %arg8[%c0_25, %c0_26], %44 {strides = array<i32>} : memref<8x4xf32, #tpu.memory_space<vmem>>, vector<8x4xf32>,
    return
  }
  func.func @transform_0(%arg0: i32) -> (i32, i32) {
    %c0_i32 = arith.constant 0 : i32
    %c0_i32_0 = arith.constant 0 : i32
    return %arg0, %c0_i32 : i32, i32
  }
  func.func @transform_1(%arg0: i32) -> (i32, i32) {
    %c0_i32 = arith.constant 0 : i32
    %c0_i32_0 = arith.constant 0 : i32
    %c0_i32_1 = arith.constant 0 : i32
    return %c0_i32, %c0_i32_0 : i32, i32
  }
  func.func @transform_2(%arg0: i32) -> (i32, i32) {
    %c0_i32 = arith.constant 0 : i32
    %c0_i32_0 = arith.constant 0 : i32
    %c0_i32_1 = arith.constant 0 : i32
    return %c0_i32, %c0_i32_0 : i32, i32
  }
  func.func @transform_3(%arg0: i32) -> (i32, i32) {
    %c0_i32 = arith.constant 0 : i32
    %c0_i32_0 = arith.constant 0 : i32
    %c0_i32_1 = arith.constant 0 : i32
    return %c0_i32, %c0_i32_0 : i32, i32
  }
  func.func @transform_4(%arg0: i32) -> (i32, i32) {
    %c0_i32 = arith.constant 0 : i32
    %c0_i32_0 = arith.constant 0 : i32
    %c0_i32_1 = arith.constant 0 : i32
    return %c0_i32, %c0_i32_0 : i32, i32
  }
  func.func @transform_5(%arg0: i32) -> (i32, i32) {
    %c0_i32 = arith.constant 0 : i32
    %c0_i32_0 = arith.constant 0 : i32
    %c0_i32_1 = arith.constant 0 : i32
    return %c0_i32, %c0_i32_0 : i32, i32
  }
  func.func @transform_6(%arg0: i32) -> (i32, i32) {
    %c0_i32 = arith.constant 0 : i32
    %c0_i32_0 = arith.constant 0 : i32
    %c0_i32_1 = arith.constant 0 : i32
    return %c0_i32, %c0_i32_0 : i32, i32
  }
  func.func @transform_7(%arg0: i32) -> (i32, i32) {
    %c0_i32 = arith.constant 0 : i32
    %c0_i32_0 = arith.constant 0 : i32
    return %arg0, %c0_i32 : i32, i32
  }
}

</mosaic_0001>

<llo_original>
// kernel: tpu_custom_call.1
$region0: #{tpu_custom_call.1}
  #allocation0 [shape = 'u32[]', space=smem, size = 0x4, offset = 0x4, fixed_abs, tag = 'smem constant byte address 0x4 - core index']
  #allocation1 [shape = 'u32[144,128]{1,0:T(1,128)}', space=vmem, size = 0x12000, scoped, tag = 'internal scratch']
  %s0 = inlined_call_operand.vmem [shape: f32[8,16], index: 0, kind: input, shape index: {}]
  %s1 = inlined_call_operand.hbm [shape: f32[16,32], index: 1, kind: input, shape index: {}]
  %s2 = inlined_call_operand.vmem [shape: f32[1,32], index: 2, kind: input, shape index: {}]
  %s3 = inlined_call_operand.vmem [shape: f32[32,32], index: 3, kind: input, shape index: {}]
  %s4 = inlined_call_operand.vmem [shape: f32[1,32], index: 4, kind: input, shape index: {}]
  %s5 = inlined_call_operand.vmem [shape: f32[32,4], index: 5, kind: input, shape index: {}]
  %s6 = inlined_call_operand.vmem [shape: f32[1,4], index: 6, kind: input, shape index: {}]
  %s7 = inlined_call_operand.vmem [shape: f32[8,4], index: 7, kind: output, shape index: {}]
  %s8 = sld [smem:[#allocation0]]
  $region42: #{tpu_custom_call.1} parent=0
    _
  %s10 = ssub.s32 1, %s8
  %s11 = scalar_select 0, %s10, %s8
  $region1: #{tpu_custom_call.1} parent=0
    #allocation2 [shape = 'u8[8192]{0}', space=vmem, size = 0x2000, scoped, tag = 'input window, operand 1, single buffered']
    #allocation3 [shape = 's32[1]{0}', space=sflag, size = 0x4, scoped, tag = 'scoped memory for tpu_custom_call.1']
    %12 = vsyncpa [#allocation3], 0
    // Predicated region
    $region2: #{tpu_custom_call.1} parent=1 // pred_check
      _
    $region3: #{tpu_custom_call.1} parent=1 // pred_check_branch
      %14 = sbr.rel (0) target = $region5
    $region4: #{tpu_custom_call.1} parent=1 // pred_region
      _
    $region5: #{tpu_custom_call.1} parent=1 // pred_fallthru
      _
    // Predicated region
    $region6: #{tpu_custom_call.1} parent=1 // pred_check
      _
    $region7: #{tpu_custom_call.1} parent=1 // pred_check_branch
      %16 = sbr.rel (0) target = $region9
    $region8: #{tpu_custom_call.1} parent=1 // pred_region
      %s18 = ssub.s32 256, 256
      %19 = vsyncadd [#allocation3], %s18
      %s20 = sshll.u32 [#allocation2], 4
      %s21 = int_to_ptr.vmem [resolvable:$true] %s20
      %26 = dma.hbm_to_vmem [thread:$0]  %s1, 256, %s21, [#allocation3], 128, 128, 8
    $region9: #{tpu_custom_call.1} parent=1 // pred_fallthru
      _
    // Predicated region
    $region10: #{tpu_custom_call.1} parent=1 // pred_check
      _
    $region11: #{tpu_custom_call.1} parent=1 // pred_check_branch
      %28 = sbr.rel (0) target = $region13
    $region12: #{tpu_custom_call.1} parent=1 // pred_region
      _
    $region13: #{tpu_custom_call.1} parent=1 // pred_fallthru
      _
    // Predicated region
    $region14: #{tpu_custom_call.1} parent=1 // pred_check
      _
    $region15: #{tpu_custom_call.1} parent=1 // pred_check_branch
      %30 = sbr.rel (0) target = $region17
    $region16: #{tpu_custom_call.1} parent=1 // pred_region
      _
    $region17: #{tpu_custom_call.1} parent=1 // pred_fallthru
      _
    // Predicated region
    $region18: #{tpu_custom_call.1} parent=1 // pred_check
      _
    $region19: #{tpu_custom_call.1} parent=1 // pred_check_branch
      %32 = sbr.rel (0) target = $region21
    $region20: #{tpu_custom_call.1} parent=1 // pred_region
      _
    $region21: #{tpu_custom_call.1} parent=1 // pred_fallthru
      _
    // Predicated region
    $region22: #{tpu_custom_call.1} parent=1 // pred_check
      _
    $region23: #{tpu_custom_call.1} parent=1 // pred_check_branch
      %34 = sbr.rel (0) target = $region25
    $region24: #{tpu_custom_call.1} parent=1 // pred_region
      _
    $region25: #{tpu_custom_call.1} parent=1 // pred_fallthru
      _
    // Predicated region
    $region26: #{tpu_custom_call.1} parent=1 // pred_check
      _
    $region27: #{tpu_custom_call.1} parent=1 // pred_check_branch
      %36 = sbr.rel (0) target = $region29
    $region28: #{tpu_custom_call.1} parent=1 // pred_region
      _
    $region29: #{tpu_custom_call.1} parent=1 // pred_fallthru
      _
    // Predicated region
    $region30: #{tpu_custom_call.1} parent=1 // pred_check
      _
    $region31: #{tpu_custom_call.1} parent=1 // pred_check_branch
      %38 = sbr.rel (0) target = $region33
    $region32: #{tpu_custom_call.1} parent=1 // pred_region
      %39 = dma.done [#allocation3], 256
    $region33: #{tpu_custom_call.1} parent=1 // pred_fallthru
      _
    %v40 = vld [vmem:[%s0] sm:$0xff]
    %v41 = vld [vmem:[#allocation2] sm:$0xff]
    %v42 = vld [vmem:[#allocation2 + $0x8] sm:$0xff]
    %v43 = vld [vmem:[%s2] sm:$0x1]
    %v45 = vlaneseq
    %v46 = vshrl.u32 %v45, 7
    %v47 = vsub.s32 0, %v46
    %v48 = vrot.slane %v43, %v47
    %vm50 = vcmask 130048
    %v52 = vsel %vm50, %v40, 0
    %54 = vmatprep.subr.mxu0 0.0
    %55 = vmatpush1.msra.mxu0 %v41
    %56 = vmatprep.subr.mxu0 0.0
    %57 = vmatpush1.msra.mxu0 %v42
    %58 = vmatprep.subr.mxu0 0.0
    %59 = vmatpush1.msra.mxu0 0.0
    %60 = vmatprep.subr.mxu0 0.0
    %61 = vmatpush1.msra.mxu0 0.0
    %62 = vmatprep.subr.mxu0 0.0
    %63 = vmatpush1.msra.mxu0 0.0
    %64 = vmatprep.subr.mxu0 0.0
    %65 = vmatpush1.msra.mxu0 0.0
    %66 = vmatprep.subr.mxu0 0.0
    %67 = vmatpush1.msra.mxu0 0.0
    %68 = vmatprep.subr.mxu0 0.0
    %69 = vmatpush1.msra.mxu0 0.0
    %70 = vmatprep.subr.mxu0 0.0
    %71 = vmatpush1.msra.mxu0 0.0
    %72 = vmatprep.subr.mxu0 0.0
    %73 = vmatpush1.msra.mxu0 0.0
    %74 = vmatprep.subr.mxu0 0.0
    %75 = vmatpush1.msra.mxu0 0.0
    %76 = vmatprep.subr.mxu0 0.0
    %77 = vmatpush1.msra.mxu0 0.0
    %78 = vmatprep.subr.mxu0 0.0
    %79 = vmatpush1.msra.mxu0 0.0
    %80 = vmatprep.subr.mxu0 0.0
    %81 = vmatpush1.msra.mxu0 0.0
    %82 = vmatprep.subr.mxu0 0.0
    %83 = vmatpush1.msra.mxu0 0.0
    %84 = vmatprep.subr.mxu0 0.0
    %85 = vmatpush1.msra.mxu0 0.0
    %86 = vmatprep.subr.mxu0 0.0
    %87 = vmatpush1.msra.mxu0 0.0
    %88 = vmatprep.subr.mxu0 0.0
    %89 = vmatpush1.msra.mxu0 0.0
    %90 = vmatprep.subr.mxu0 0.0
    %91 = vmatpush1.msra.mxu0 0.0
    %92 = vmatprep.subr.mxu0 0.0
    %93 = vmatpush1.msra.mxu0 0.0
    %94 = vmatprep.subr.mxu0 0.0
    %95 = vmatpush1.msra.mxu0 0.0
    %96 = vmatprep.subr.mxu0 0.0
    %97 = vmatpush1.msra.mxu0 0.0
    %98 = vmatprep.subr.mxu0 0.0
    %99 = vmatpush1.msra.mxu0 0.0
    %100 = vmatprep.subr.mxu0 0.0
    %101 = vmatpush1.msra.mxu0 0.0
    %102 = vmatprep.subr.mxu0 0.0
    %103 = vmatpush1.msra.mxu0 0.0
    %104 = vmatprep.subr.mxu0 0.0
    %105 = vmatpush1.msra.mxu0 0.0
    %106 = vmatprep.subr.mxu0 0.0
    %107 = vmatpush1.msra.mxu0 0.0
    %108 = vmatprep.subr.mxu0 0.0
    %109 = vmatpush1.msra.mxu0 0.0
    %110 = vmatprep.subr.mxu0 0.0
    %111 = vmatpush1.msra.mxu0 0.0
    %112 = vmatprep.subr.mxu0 0.0
    %113 = vmatpush1.msra.mxu0 0.0
    %114 = vmatprep.subr.mxu0 0.0
    %115 = vmatpush1.msra.mxu0 0.0
    %116 = vmatprep.subr.mxu0 0.0
    %117 = vmatpush1.msra.mxu0 0.0
    %118 = vmatprep.mubr.f32.mxu0 0.0
    %119 = vmatmul.mubr.f32.gmra.mrb[0].mxu0 %v52
    %v120 = vpop.f32.mrb[0].mxu0
    %v121 = vadd.f32 %v48, %v120
    %v122 = vpop.f32.mrb[0].mxu0
    %123 = vdwg.mxu0
    %vm124 = vcmp.gt.f32.partialorder %v121, 0.0
    %v125 = vmul.f32 %v121, 1.442695
    %v126 = vpow.pop %v125
    %v127 = vsub.f32 %v126, 1.0
    %v128 = vmul.f32 %v127, 1.6732632
    %v129 = vsel %vm124, %v121, %v128
    %v130 = vmul.f32 %v129, 1.050701
    %v131 = vld [vmem:[%s3] sm:$0xff]
    %v132 = vld [vmem:[%s3 + $0x8] sm:$0xff]
    %v133 = vld [vmem:[%s3 + $0x10] sm:$0xff]
    %v134 = vld [vmem:[%s3 + $0x18] sm:$0xff]
    %v135 = vld [vmem:[%s4] sm:$0x1]
    %v137 = vlaneseq
    %v138 = vshrl.u32 %v137, 7
    %v139 = vsub.s32 0, %v138
    %v140 = vrot.slane %v135, %v139
    %vm142 = vcmask 261120
    %v144 = vsel %vm142, %v130, 0
    %146 = vmatprep.subr.mxu0 0.0
    %147 = vmatpush1.msra.mxu0 %v131
    %148 = vmatprep.subr.mxu0 0.0
    %149 = vmatpush1.msra.mxu0 %v132
    %150 = vmatprep.subr.mxu0 0.0
    %151 = vmatpush1.msra.mxu0 %v133
    %152 = vmatprep.subr.mxu0 0.0
    %153 = vmatpush1.msra.mxu0 %v134
    %154 = vmatprep.subr.mxu0 0.0
    %155 = vmatpush1.msra.mxu0 0.0
    %156 = vmatprep.subr.mxu0 0.0
    %157 = vmatpush1.msra.mxu0 0.0
    %158 = vmatprep.subr.mxu0 0.0
    %159 = vmatpush1.msra.mxu0 0.0
    %160 = vmatprep.subr.mxu0 0.0
    %161 = vmatpush1.msra.mxu0 0.0
    %162 = vmatprep.subr.mxu0 0.0
    %163 = vmatpush1.msra.mxu0 0.0
    %164 = vmatprep.subr.mxu0 0.0
    %165 = vmatpush1.msra.mxu0 0.0
    %166 = vmatprep.subr.mxu0 0.0
    %167 = vmatpush1.msra.mxu0 0.0
    %168 = vmatprep.subr.mxu0 0.0
    %169 = vmatpush1.msra.mxu0 0.0
    %170 = vmatprep.subr.mxu0 0.0
    %171 = vmatpush1.msra.mxu0 0.0
    %172 = vmatprep.subr.mxu0 0.0
    %173 = vmatpush1.msra.mxu0 0.0
    %174 = vmatprep.subr.mxu0 0.0
    %175 = vmatpush1.msra.mxu0 0.0
    %176 = vmatprep.subr.mxu0 0.0
    %177 = vmatpush1.msra.mxu0 0.0
    %178 = vmatprep.subr.mxu0 0.0
    %179 = vmatpush1.msra.mxu0 0.0
    %180 = vmatprep.subr.mxu0 0.0
    %181 = vmatpush1.msra.mxu0 0.0
    %182 = vmatprep.subr.mxu0 0.0
    %183 = vmatpush1.msra.mxu0 0.0
    %184 = vmatprep.subr.mxu0 0.0
    %185 = vmatpush1.msra.mxu0 0.0
    %186 = vmatprep.subr.mxu0 0.0
    %187 = vmatpush1.msra.mxu0 0.0
    %188 = vmatprep.subr.mxu0 0.0
    %189 = vmatpush1.msra.mxu0 0.0
    %190 = vmatprep.subr.mxu0 0.0
    %191 = vmatpush1.msra.mxu0 0.0
    %192 = vmatprep.subr.mxu0 0.0
    %193 = vmatpush1.msra.mxu0 0.0
    %194 = vmatprep.subr.mxu0 0.0
    %195 = vmatpush1.msra.mxu0 0.0
    %196 = vmatprep.subr.mxu0 0.0
    %197 = vmatpush1.msra.mxu0 0.0
    %198 = vmatprep.subr.mxu0 0.0
    %199 = vmatpush1.msra.mxu0 0.0
    %200 = vmatprep.subr.mxu0 0.0
    %201 = vmatpush1.msra.mxu0 0.0
    %202 = vmatprep.subr.mxu0 0.0
    %203 = vmatpush1.msra.mxu0 0.0
    %204 = vmatprep.subr.mxu0 0.0
    %205 = vmatpush1.msra.mxu0 0.0
    %206 = vmatprep.subr.mxu0 0.0
    %207 = vmatpush1.msra.mxu0 0.0
    %208 = vmatprep.subr.mxu0 0.0
    %209 = vmatpush1.msra.mxu0 0.0
    %210 = vmatprep.mubr.f32.mxu0 0.0
    %211 = vmatmul.mubr.f32.gmra.mrb[0].mxu0 %v144
    %v212 = vpop.f32.mrb[0].mxu0
    %v213 = vadd.f32 %v140, %v212
    %v214 = vpop.f32.mrb[0].mxu0
    %215 = vdwg.mxu0
    %vm216 = vcmp.gt.f32.partialorder %v213, 0.0
    %v217 = vmul.f32 %v213, 1.442695
    %v218 = vpow.pop %v217
    %v219 = vsub.f32 %v218, 1.0
    %v220 = vmul.f32 %v219, 1.6732632
    %v221 = vsel %vm216, %v213, %v220
    %v222 = vmul.f32 %v221, 1.050701
    %v223 = vld [vmem:[%s5] sm:$0xff]
    %v224 = vld [vmem:[%s5 + $0x8] sm:$0xff]
    %v225 = vld [vmem:[%s5 + $0x10] sm:$0xff]
    %v226 = vld [vmem:[%s5 + $0x18] sm:$0xff]
    %v227 = vld [vmem:[%s6] sm:$0x1]
    %v229 = vlaneseq
    %v230 = vshrl.u32 %v229, 7
    %v231 = vsub.s32 0, %v230
    %v232 = vrot.slane %v227, %v231
    %v235 = vsel %vm142, %v222, 0
    %237 = vmatprep.subr.mxu0 0.0
    %238 = vmatpush1.msra.mxu0 %v223
    %239 = vmatprep.subr.mxu0 0.0
    %240 = vmatpush1.msra.mxu0 %v224
    %241 = vmatprep.subr.mxu0 0.0
    %242 = vmatpush1.msra.mxu0 %v225
    %243 = vmatprep.subr.mxu0 0.0
    %244 = vmatpush1.msra.mxu0 %v226
    %245 = vmatprep.subr.mxu0 0.0
    %246 = vmatpush1.msra.mxu0 0.0
    %247 = vmatprep.subr.mxu0 0.0
    %248 = vmatpush1.msra.mxu0 0.0
    %249 = vmatprep.subr.mxu0 0.0
    %250 = vmatpush1.msra.mxu0 0.0
    %251 = vmatprep.subr.mxu0 0.0
    %252 = vmatpush1.msra.mxu0 0.0
    %253 = vmatprep.subr.mxu0 0.0
    %254 = vmatpush1.msra.mxu0 0.0
    %255 = vmatprep.subr.mxu0 0.0
    %256 = vmatpush1.msra.mxu0 0.0
    %257 = vmatprep.subr.mxu0 0.0
    %258 = vmatpush1.msra.mxu0 0.0
    %259 = vmatprep.subr.mxu0 0.0
    %260 = vmatpush1.msra.mxu0 0.0
    %261 = vmatprep.subr.mxu0 0.0
    %262 = vmatpush1.msra.mxu0 0.0
    %263 = vmatprep.subr.mxu0 0.0
    %264 = vmatpush1.msra.mxu0 0.0
    %265 = vmatprep.subr.mxu0 0.0
    %266 = vmatpush1.msra.mxu0 0.0
    %267 = vmatprep.subr.mxu0 0.0
    %268 = vmatpush1.msra.mxu0 0.0
    %269 = vmatprep.subr.mxu0 0.0
    %270 = vmatpush1.msra.mxu0 0.0
    %271 = vmatprep.subr.mxu0 0.0
    %272 = vmatpush1.msra.mxu0 0.0
    %273 = vmatprep.subr.mxu0 0.0
    %274 = vmatpush1.msra.mxu0 0.0
    %275 = vmatprep.subr.mxu0 0.0
    %276 = vmatpush1.msra.mxu0 0.0
    %277 = vmatprep.subr.mxu0 0.0
    %278 = vmatpush1.msra.mxu0 0.0
    %279 = vmatprep.subr.mxu0 0.0
    %280 = vmatpush1.msra.mxu0 0.0
    %281 = vmatprep.subr.mxu0 0.0
    %282 = vmatpush1.msra.mxu0 0.0
    %283 = vmatprep.subr.mxu0 0.0
    %284 = vmatpush1.msra.mxu0 0.0
    %285 = vmatprep.subr.mxu0 0.0
    %286 = vmatpush1.msra.mxu0 0.0
    %287 = vmatprep.subr.mxu0 0.0
    %288 = vmatpush1.msra.mxu0 0.0
    %289 = vmatprep.subr.mxu0 0.0
    %290 = vmatpush1.msra.mxu0 0.0
    %291 = vmatprep.subr.mxu0 0.0
    %292 = vmatpush1.msra.mxu0 0.0
    %293 = vmatprep.subr.mxu0 0.0
    %294 = vmatpush1.msra.mxu0 0.0
    %295 = vmatprep.subr.mxu0 0.0
    %296 = vmatpush1.msra.mxu0 0.0
    %297 = vmatprep.subr.mxu0 0.0
    %298 = vmatpush1.msra.mxu0 0.0
    %299 = vmatprep.subr.mxu0 0.0
    %300 = vmatpush1.msra.mxu0 0.0
    %301 = vmatprep.mubr.f32.mxu0 0.0
    %302 = vmatmul.mubr.f32.gmra.mrb[0].mxu0 %v235
    %v303 = vpop.f32.mrb[0].mxu0
    %v304 = vadd.f32 %v232, %v303
    %v305 = vpop.f32.mrb[0].mxu0
    %306 = vdwg.mxu0
    %vm307 = vcmask 31744
    %v308 = vsel %vm307, %v304, -inf
    %309 = vmax.xlane.f32.xlu0 %v308
    %v310 = vpop.xlane.xlu0 %309
    %v311 = vsub.f32 %v304, %v310
    %v312 = vmul.f32 %v311, 1.442695
    %v313 = vpow.pop %v312
    %v314 = vsel %vm307, %v313, 0.0
    %315 = vadd.xlane.f32.xlu0 %v314
    %v316 = vpop.xlane.xlu0 %315
    %v317 = vrcp.pop %v316
    %v318 = vmul.f32 %v313, %v317
    %319 = vst.msk [vmem:[%s7] sm:$0xff] %vm307, %v318
    // Predicated region
    $region34: #{tpu_custom_call.1} parent=1 // pred_check
      _
    $region35: #{tpu_custom_call.1} parent=1 // pred_check_branch
      %321 = sbr.rel (0) target = $region37
    $region36: #{tpu_custom_call.1} parent=1 // pred_region
      _
    $region37: #{tpu_custom_call.1} parent=1 // pred_fallthru
      _
    // Predicated region
    $region38: #{tpu_custom_call.1} parent=1 // pred_check
      _
    $region39: #{tpu_custom_call.1} parent=1 // pred_check_branch
      %323 = sbr.rel (0) target = $region41
    $region40: #{tpu_custom_call.1} parent=1 // pred_region
      _
    $region41: #{tpu_custom_call.1} parent=1 // pred_fallthru
      _
    %324 = vsyncpa [#allocation3], 1

// kernel: tpu_custom_call.1
$region0: #{tpu_custom_call.1}
  #allocation0 [shape = 'u32[]', space=smem, size = 0x4, offset = 0x4, fixed_abs, tag = 'smem constant byte address 0x4 - core index']
  #allocation1 [shape = 'u32[144,128]{1,0:T(1,128)}', space=vmem, size = 0x12000, scoped, tag = 'internal scratch']
  %s0 = inlined_call_operand.vmem [shape: f32[8,16], index: 0, kind: input, shape index: {}]
  %s1 = inlined_call_operand.hbm [shape: f32[16,32], index: 1, kind: input, shape index: {}]
  %s2 = inlined_call_operand.vmem [shape: f32[1,32], index: 2, kind: input, shape index: {}]
  %s3 = inlined_call_operand.vmem [shape: f32[32,32], index: 3, kind: input, shape index: {}]
  %s4 = inlined_call_operand.vmem [shape: f32[1,32], index: 4, kind: input, shape index: {}]
  %s5 = inlined_call_operand.vmem [shape: f32[32,4], index: 5, kind: input, shape index: {}]
  %s6 = inlined_call_operand.vmem [shape: f32[1,4], index: 6, kind: input, shape index: {}]
  %s7 = inlined_call_operand.vmem [shape: f32[8,4], index: 7, kind: output, shape index: {}]
  %s8 = sld [smem:[#allocation0]]
  $region42: #{tpu_custom_call.1} parent=0
    _
  %s10 = ssub.s32 1, %s8
  %s11 = scalar_select 0, %s10, %s8
  $region1: #{tpu_custom_call.1} parent=0
    #allocation2 [shape = 'u8[8192]{0}', space=vmem, size = 0x2000, scoped, tag = 'input window, operand 1, single buffered']
    #allocation3 [shape = 's32[1]{0}', space=sflag, size = 0x4, scoped, tag = 'scoped memory for tpu_custom_call.1']
    %12 = vsyncpa [#allocation3], 0
    // Predicated region
    $region2: #{tpu_custom_call.1} parent=1 // pred_check
      _
    $region3: #{tpu_custom_call.1} parent=1 // pred_check_branch
      %14 = sbr.rel (0) target = $region5
    $region4: #{tpu_custom_call.1} parent=1 // pred_region
      _
    $region5: #{tpu_custom_call.1} parent=1 // pred_fallthru
      _
    // Predicated region
    $region6: #{tpu_custom_call.1} parent=1 // pred_check
      _
    $region7: #{tpu_custom_call.1} parent=1 // pred_check_branch
      %16 = sbr.rel (0) target = $region9
    $region8: #{tpu_custom_call.1} parent=1 // pred_region
      %s18 = ssub.s32 256, 256
      %19 = vsyncadd [#allocation3], %s18
      %s20 = sshll.u32 [#allocation2], 4
      %s21 = int_to_ptr.vmem [resolvable:$true] %s20
      %26 = dma.hbm_to_vmem [thread:$0]  %s1, 256, %s21, [#allocation3], 128, 128, 8
    $region9: #{tpu_custom_call.1} parent=1 // pred_fallthru
      _
    // Predicated region
    $region10: #{tpu_custom_call.1} parent=1 // pred_check
      _
    $region11: #{tpu_custom_call.1} parent=1 // pred_check_branch
      %28 = sbr.rel (0) target = $region13
    $region12: #{tpu_custom_call.1} parent=1 // pred_region
      _
    $region13: #{tpu_custom_call.1} parent=1 // pred_fallthru
      _
    // Predicated region
    $region14: #{tpu_custom_call.1} parent=1 // pred_check
      _
    $region15: #{tpu_custom_call.1} parent=1 // pred_check_branch
      %30 = sbr.rel (0) target = $region17
    $region16: #{tpu_custom_call.1} parent=1 // pred_region
      _
    $region17: #{tpu_custom_call.1} parent=1 // pred_fallthru
      _
    // Predicated region
    $region18: #{tpu_custom_call.1} parent=1 // pred_check
      _
    $region19: #{tpu_custom_call.1} parent=1 // pred_check_branch
      %32 = sbr.rel (0) target = $region21
    $region20: #{tpu_custom_call.1} parent=1 // pred_region
      _
    $region21: #{tpu_custom_call.1} parent=1 // pred_fallthru
      _
    // Predicated region
    $region22: #{tpu_custom_call.1} parent=1 // pred_check
      _
    $region23: #{tpu_custom_call.1} parent=1 // pred_check_branch
      %34 = sbr.rel (0) target = $region25
    $region24: #{tpu_custom_call.1} parent=1 // pred_region
      _
    $region25: #{tpu_custom_call.1} parent=1 // pred_fallthru
      _
    // Predicated region
    $region26: #{tpu_custom_call.1} parent=1 // pred_check
      _
    $region27: #{tpu_custom_call.1} parent=1 // pred_check_branch
      %36 = sbr.rel (0) target = $region29
    $region28: #{tpu_custom_call.1} parent=1 // pred_region
      _
    $region29: #{tpu_custom_call.1} parent=1 // pred_fallthru
      _
    // Predicated region
    $region30: #{tpu_custom_call.1} parent=1 // pred_check
      _
    $region31: #{tpu_custom_call.1} parent=1 // pred_check_branch
      %38 = sbr.rel (0) target = $region33
    $region32: #{tpu_custom_call.1} parent=1 // pred_region
      %39 = dma.done [#allocation3], 256
    $region33: #{tpu_custom_call.1} parent=1 // pred_fallthru
      _
    %v40 = vld [vmem:[%s0] sm:$0xff]
    %v41 = vld [vmem:[#allocation2] sm:$0xff]
    %v42 = vld [vmem:[#allocation2 + $0x8] sm:$0xff]
    %v43 = vld [vmem:[%s2] sm:$0x1]
    %v45 = vlaneseq
    %v46 = vshrl.u32 %v45, 7
    %v47 = vsub.s32 0, %v46
    %v48 = vrot.slane %v43, %v47
    %vm50 = vcmask 130048
    %v52 = vsel %vm50, %v40, 0
    %54 = vmatprep.subr.mxu0 0.0
    %55 = vmatpush1.msra.mxu0 %v41
    %56 = vmatprep.subr.mxu0 0.0
    %57 = vmatpush1.msra.mxu0 %v42
    %58 = vmatprep.subr.mxu0 0.0
    %59 = vmatpush1.msra.mxu0 0.0
    %60 = vmatprep.subr.mxu0 0.0
    %61 = vmatpush1.msra.mxu0 0.0
    %62 = vmatprep.subr.mxu0 0.0
    %63 = vmatpush1.msra.mxu0 0.0
    %64 = vmatprep.subr.mxu0 0.0
    %65 = vmatpush1.msra.mxu0 0.0
    %66 = vmatprep.subr.mxu0 0.0
    %67 = vmatpush1.msra.mxu0 0.0
    %68 = vmatprep.subr.mxu0 0.0
    %69 = vmatpush1.msra.mxu0 0.0
    %70 = vmatprep.subr.mxu0 0.0
    %71 = vmatpush1.msra.mxu0 0.0
    %72 = vmatprep.subr.mxu0 0.0
    %73 = vmatpush1.msra.mxu0 0.0
    %74 = vmatprep.subr.mxu0 0.0
    %75 = vmatpush1.msra.mxu0 0.0
    %76 = vmatprep.subr.mxu0 0.0
    %77 = vmatpush1.msra.mxu0 0.0
    %78 = vmatprep.subr.mxu0 0.0
    %79 = vmatpush1.msra.mxu0 0.0
    %80 = vmatprep.subr.mxu0 0.0
    %81 = vmatpush1.msra.mxu0 0.0
    %82 = vmatprep.subr.mxu0 0.0
    %83 = vmatpush1.msra.mxu0 0.0
    %84 = vmatprep.subr.mxu0 0.0
    %85 = vmatpush1.msra.mxu0 0.0
    %86 = vmatprep.subr.mxu0 0.0
    %87 = vmatpush1.msra.mxu0 0.0
    %88 = vmatprep.subr.mxu0 0.0
    %89 = vmatpush1.msra.mxu0 0.0
    %90 = vmatprep.subr.mxu0 0.0
    %91 = vmatpush1.msra.mxu0 0.0
    %92 = vmatprep.subr.mxu0 0.0
    %93 = vmatpush1.msra.mxu0 0.0
    %94 = vmatprep.subr.mxu0 0.0
    %95 = vmatpush1.msra.mxu0 0.0
    %96 = vmatprep.subr.mxu0 0.0
    %97 = vmatpush1.msra.mxu0 0.0
    %98 = vmatprep.subr.mxu0 0.0
    %99 = vmatpush1.msra.mxu0 0.0
    %100 = vmatprep.subr.mxu0 0.0
    %101 = vmatpush1.msra.mxu0 0.0
    %102 = vmatprep.subr.mxu0 0.0
    %103 = vmatpush1.msra.mxu0 0.0
    %104 = vmatprep.subr.mxu0 0.0
    %105 = vmatpush1.msra.mxu0 0.0
    %106 = vmatprep.subr.mxu0 0.0
    %107 = vmatpush1.msra.mxu0 0.0
    %108 = vmatprep.subr.mxu0 0.0
    %109 = vmatpush1.msra.mxu0 0.0
    %110 = vmatprep.subr.mxu0 0.0
    %111 = vmatpush1.msra.mxu0 0.0
    %112 = vmatprep.subr.mxu0 0.0
    %113 = vmatpush1.msra.mxu0 0.0
    %114 = vmatprep.subr.mxu0 0.0
    %115 = vmatpush1.msra.mxu0 0.0
    %116 = vmatprep.subr.mxu0 0.0
    %117 = vmatpush1.msra.mxu0 0.0
    %118 = vmatprep.mubr.f32.mxu0 0.0
    %119 = vmatmul.mubr.f32.gmra.mrb[0].mxu0 %v52
    %v120 = vpop.f32.mrb[0].mxu0
    %v121 = vadd.f32 %v48, %v120
    %v122 = vpop.f32.mrb[0].mxu0
    %123 = vdwg.mxu0
    %vm124 = vcmp.gt.f32.partialorder %v121, 0.0
    %v125 = vmul.f32 %v121, 1.442695
    %v126 = vpow.pop %v125
    %v127 = vsub.f32 %v126, 1.0
    %v128 = vmul.f32 %v127, 1.6732632
    %v129 = vsel %vm124, %v121, %v128
    %v130 = vmul.f32 %v129, 1.050701
    %v131 = vld [vmem:[%s3] sm:$0xff]
    %v132 = vld [vmem:[%s3 + $0x8] sm:$0xff]
    %v133 = vld [vmem:[%s3 + $0x10] sm:$0xff]
    %v134 = vld [vmem:[%s3 + $0x18] sm:$0xff]
    %v135 = vld [vmem:[%s4] sm:$0x1]
    %v137 = vlaneseq
    %v138 = vshrl.u32 %v137, 7
    %v139 = vsub.s32 0, %v138
    %v140 = vrot.slane %v135, %v139
    %vm142 = vcmask 261120
    %v144 = vsel %vm142, %v130, 0
    %146 = vmatprep.subr.mxu0 0.0
    %147 = vmatpush1.msra.mxu0 %v131
    %148 = vmatprep.subr.mxu0 0.0
    %149 = vmatpush1.msra.mxu0 %v132
    %150 = vmatprep.subr.mxu0 0.0
    %151 = vmatpush1.msra.mxu0 %v133
    %152 = vmatprep.subr.mxu0 0.0
    %153 = vmatpush1.msra.mxu0 %v134
    %154 = vmatprep.subr.mxu0 0.0
    %155 = vmatpush1.msra.mxu0 0.0
    %156 = vmatprep.subr.mxu0 0.0
    %157 = vmatpush1.msra.mxu0 0.0
    %158 = vmatprep.subr.mxu0 0.0
    %159 = vmatpush1.msra.mxu0 0.0
    %160 = vmatprep.subr.mxu0 0.0
    %161 = vmatpush1.msra.mxu0 0.0
    %162 = vmatprep.subr.mxu0 0.0
    %163 = vmatpush1.msra.mxu0 0.0
    %164 = vmatprep.subr.mxu0 0.0
    %165 = vmatpush1.msra.mxu0 0.0
    %166 = vmatprep.subr.mxu0 0.0
    %167 = vmatpush1.msra.mxu0 0.0
    %168 = vmatprep.subr.mxu0 0.0
    %169 = vmatpush1.msra.mxu0 0.0
    %170 = vmatprep.subr.mxu0 0.0
    %171 = vmatpush1.msra.mxu0 0.0
    %172 = vmatprep.subr.mxu0 0.0
    %173 = vmatpush1.msra.mxu0 0.0
    %174 = vmatprep.subr.mxu0 0.0
    %175 = vmatpush1.msra.mxu0 0.0
    %176 = vmatprep.subr.mxu0 0.0
    %177 = vmatpush1.msra.mxu0 0.0
    %178 = vmatprep.subr.mxu0 0.0
    %179 = vmatpush1.msra.mxu0 0.0
    %180 = vmatprep.subr.mxu0 0.0
    %181 = vmatpush1.msra.mxu0 0.0
    %182 = vmatprep.subr.mxu0 0.0
    %183 = vmatpush1.msra.mxu0 0.0
    %184 = vmatprep.subr.mxu0 0.0
    %185 = vmatpush1.msra.mxu0 0.0
    %186 = vmatprep.subr.mxu0 0.0
    %187 = vmatpush1.msra.mxu0 0.0
    %188 = vmatprep.subr.mxu0 0.0
    %189 = vmatpush1.msra.mxu0 0.0
    %190 = vmatprep.subr.mxu0 0.0
    %191 = vmatpush1.msra.mxu0 0.0
    %192 = vmatprep.subr.mxu0 0.0
    %193 = vmatpush1.msra.mxu0 0.0
    %194 = vmatprep.subr.mxu0 0.0
    %195 = vmatpush1.msra.mxu0 0.0
    %196 = vmatprep.subr.mxu0 0.0
    %197 = vmatpush1.msra.mxu0 0.0
    %198 = vmatprep.subr.mxu0 0.0
    %199 = vmatpush1.msra.mxu0 0.0
    %200 = vmatprep.subr.mxu0 0.0
    %201 = vmatpush1.msra.mxu0 0.0
    %202 = vmatprep.subr.mxu0 0.0
    %203 = vmatpush1.msra.mxu0 0.0
    %204 = vmatprep.subr.mxu0 0.0
    %205 = vmatpush1.msra.mxu0 0.0
    %206 = vmatprep.subr.mxu0 0.0
    %207 = vmatpush1.msra.mxu0 0.0
    %208 = vmatprep.subr.mxu0 0.0
    %209 = vmatpush1.msra.mxu0 0.0
    %210 = vmatprep.mubr.f32.mxu0 0.0
    %211 = vmatmul.mubr.f32.gmra.mrb[0].mxu0 %v144
    %v212 = vpop.f32.mrb[0].mxu0
    %v213 = vadd.f32 %v140, %v212
    %v214 = vpop.f32.mrb[0].mxu0
    %215 = vdwg.mxu0
    %vm216 = vcmp.gt.f32.partialorder %v213, 0.0
    %v217 = vmul.f32 %v213, 1.442695
    %v218 = vpow.pop %v217
    %v219 = vsub.f32 %v218, 1.0
    %v220 = vmul.f32 %v219, 1.6732632
    %v221 = vsel %vm216, %v213, %v220
    %v222 = vmul.f32 %v221, 1.050701
    %v223 = vld [vmem:[%s5] sm:$0xff]
    %v224 = vld [vmem:[%s5 + $0x8] sm:$0xff]
    %v225 = vld [vmem:[%s5 + $0x10] sm:$0xff]
    %v226 = vld [vmem:[%s5 + $0x18] sm:$0xff]
    %v227 = vld [vmem:[%s6] sm:$0x1]
    %v229 = vlaneseq
    %v230 = vshrl.u32 %v229, 7
    %v231 = vsub.s32 0, %v230
    %v232 = vrot.slane %v227, %v231
    %v235 = vsel %vm142, %v222, 0
    %237 = vmatprep.subr.mxu0 0.0
    %238 = vmatpush1.msra.mxu0 %v223
    %239 = vmatprep.subr.mxu0 0.0
    %240 = vmatpush1.msra.mxu0 %v224
    %241 = vmatprep.subr.mxu0 0.0
    %242 = vmatpush1.msra.mxu0 %v225
    %243 = vmatprep.subr.mxu0 0.0
    %244 = vmatpush1.msra.mxu0 %v226
    %245 = vmatprep.subr.mxu0 0.0
    %246 = vmatpush1.msra.mxu0 0.0
    %247 = vmatprep.subr.mxu0 0.0
    %248 = vmatpush1.msra.mxu0 0.0
    %249 = vmatprep.subr.mxu0 0.0
    %250 = vmatpush1.msra.mxu0 0.0
    %251 = vmatprep.subr.mxu0 0.0
    %252 = vmatpush1.msra.mxu0 0.0
    %253 = vmatprep.subr.mxu0 0.0
    %254 = vmatpush1.msra.mxu0 0.0
    %255 = vmatprep.subr.mxu0 0.0
    %256 = vmatpush1.msra.mxu0 0.0
    %257 = vmatprep.subr.mxu0 0.0
    %258 = vmatpush1.msra.mxu0 0.0
    %259 = vmatprep.subr.mxu0 0.0
    %260 = vmatpush1.msra.mxu0 0.0
    %261 = vmatprep.subr.mxu0 0.0
    %262 = vmatpush1.msra.mxu0 0.0
    %263 = vmatprep.subr.mxu0 0.0
    %264 = vmatpush1.msra.mxu0 0.0
    %265 = vmatprep.subr.mxu0 0.0
    %266 = vmatpush1.msra.mxu0 0.0
    %267 = vmatprep.subr.mxu0 0.0
    %268 = vmatpush1.msra.mxu0 0.0
    %269 = vmatprep.subr.mxu0 0.0
    %270 = vmatpush1.msra.mxu0 0.0
    %271 = vmatprep.subr.mxu0 0.0
    %272 = vmatpush1.msra.mxu0 0.0
    %273 = vmatprep.subr.mxu0 0.0
    %274 = vmatpush1.msra.mxu0 0.0
    %275 = vmatprep.subr.mxu0 0.0
    %276 = vmatpush1.msra.mxu0 0.0
    %277 = vmatprep.subr.mxu0 0.0
    %278 = vmatpush1.msra.mxu0 0.0
    %279 = vmatprep.subr.mxu0 0.0
    %280 = vmatpush1.msra.mxu0 0.0
    %281 = vmatprep.subr.mxu0 0.0
    %282 = vmatpush1.msra.mxu0 0.0
    %283 = vmatprep.subr.mxu0 0.0
    %284 = vmatpush1.msra.mxu0 0.0
    %285 = vmatprep.subr.mxu0 0.0
    %286 = vmatpush1.msra.mxu0 0.0
    %287 = vmatprep.subr.mxu0 0.0
    %288 = vmatpush1.msra.mxu0 0.0
    %289 = vmatprep.subr.mxu0 0.0
    %290 = vmatpush1.msra.mxu0 0.0
    %291 = vmatprep.subr.mxu0 0.0
    %292 = vmatpush1.msra.mxu0 0.0
    %293 = vmatprep.subr.mxu0 0.0
    %294 = vmatpush1.msra.mxu0 0.0
    %295 = vmatprep.subr.mxu0 0.0
    %296 = vmatpush1.msra.mxu0 0.0
    %297 = vmatprep.subr.mxu0 0.0
    %298 = vmatpush1.msra.mxu0 0.0
    %299 = vmatprep.subr.mxu0 0.0
    %300 = vmatpush1.msra.mxu0 0.0
    %301 = vmatprep.mubr.f32.mxu0 0.0
    %302 = vmatmul.mubr.f32.gmra.mrb[0].mxu0 %v235
    %v303 = vpop.f32.mrb[0].mxu0
    %v304 = vadd.f32 %v232, %v303
    %v305 = vpop.f32.mrb[0].mxu0
    %306 = vdwg.mxu0
    %vm307 = vcmask 31744
    %v308 = vsel %vm307, %v304, -inf
    %309 = vmax.xlane.f32.xlu0 %v308
    %v310 = vpop.xlane.xlu0 %309
    %v311 = vsub.f32 %v304, %v310
    %v312 = vmul.f32 %v311, 1.442695
    %v313 = vpow.pop %v312
    %v314 = vsel %vm307, %v313, 0.0
    %315 = vadd.xlane.f32.xlu0 %v314
    %v316 = vpop.xlane.xlu0 %315
    %v317 = vrcp.pop %v316
    %v318 = vmul.f32 %v313, %v317
    %319 = vst.msk [vmem:[%s7] sm:$0xff] %vm307, %v318
    // Predicated region
    $region34: #{tpu_custom_call.1} parent=1 // pred_check
      _
    $region35: #{tpu_custom_call.1} parent=1 // pred_check_branch
      %321 = sbr.rel (0) target = $region37
    $region36: #{tpu_custom_call.1} parent=1 // pred_region
      _
    $region37: #{tpu_custom_call.1} parent=1 // pred_fallthru
      _
    // Predicated region
    $region38: #{tpu_custom_call.1} parent=1 // pred_check
      _
    $region39: #{tpu_custom_call.1} parent=1 // pred_check_branch
      %323 = sbr.rel (0) target = $region41
    $region40: #{tpu_custom_call.1} parent=1 // pred_region
      _
    $region41: #{tpu_custom_call.1} parent=1 // pred_fallthru
      _
    %324 = vsyncpa [#allocation3], 1

</llo_original>
